<compile_context>
chip_gen: v7x
topology: tpu7x:2x2x1
jax: 0.10.0
libtpu: 0.0.40
codegen_flags: <defaults>
</compile_context>

<pallas_src>
import math

import jax
import jax.numpy as jnp
from jax.experimental import pallas as pl
from jax.experimental.pallas import tpu as pltpu


# ----------------------------------------------------------------------------
# Params (match torch: xavier_uniform_ weights, zero biases)
# ----------------------------------------------------------------------------
def _xavier_uniform(key, shape, fan_in, fan_out, dtype=jnp.float32):
    bound = math.sqrt(6.0 / (fan_in + fan_out))
    return jax.random.uniform(key, shape, dtype=dtype, minval=-bound, maxval=bound)


def make_params(seed=0):
    k1, k2, k3 = jax.random.split(jax.random.PRNGKey(seed), 3)
    return {
        # w1, w2 stored (out, in) = PyTorch layout (kernel computes W @ x).
        "w1": _xavier_uniform(k1, (64, 4), fan_in=4, fan_out=64),
        "b1": jnp.zeros((64, 1), jnp.float32),
        "w2": _xavier_uniform(k2, (64, 64), fan_in=64, fan_out=64),
        "b2": jnp.zeros((64, 1), jnp.float32),
        # w3 stored (in, out) = (64, 1) so layer 3 is a lane-wise mul + sublane reduce.
        "w3": _xavier_uniform(k3, (64, 1), fan_in=64, fan_out=1),
        "b3": jnp.zeros((1, 1), jnp.float32),
    }


# ----------------------------------------------------------------------------
# Kernel
# ----------------------------------------------------------------------------
def tetris_mlp_kernel(x_ref, w1_ref, b1_ref, w2_ref, b2_ref, w3_ref, b3_ref, o_ref):
    # x_ref: (4, tile_b) bf16   w1: (64,4) bf16   b1: (64,1) f32
    # w2: (64,64) bf16          b2: (64,1) f32
    # w3: (64,1)  bf16          b3: (1,1)  f32    o_ref: (1, tile_b) f32
    x = x_ref[...].astype(jnp.float32)          # (4, tile_b)
    w1 = w1_ref[...].astype(jnp.float32)        # (64, 4)

    # --- fc1: Linear(4, 64) + ReLU -------------------------------------------
    # K=4 would badly underfill the MXU; do it as 4 VPU broadcast-FMAs instead.
    h = (w1[:, 0:1] * x[0:1, :]
         + w1[:, 1:2] * x[1:2, :]
         + w1[:, 2:3] * x[2:3, :]
         + w1[:, 3:4] * x[3:4, :]
         + b1_ref[...])                          # (64, tile_b) f32
    h = jnp.maximum(h, 0.0).astype(jnp.bfloat16)

    # --- fc2: Linear(64, 64) + ReLU ------------------------------------------
    # (64,64) @ (64, tile_b): batch on the N/lane axis, bf16 in, f32 accumulate.
    h = jnp.dot(w2_ref[...], h, preferred_element_type=jnp.float32)
    h = jnp.maximum(h + b2_ref[...], 0.0)        # (64, tile_b) f32

    # --- fc3: Linear(64, 1) ---------------------------------------------------
    # out=1: VPU multiply + cross-sublane reduce; avoids a 1-lane MXU pass and
    # keeps the store lane-dense (1, tile_b).
    w3 = w3_ref[...].astype(jnp.float32)         # (64, 1)
    out = jnp.sum(w3 * h, axis=0, keepdims=True) + b3_ref[...]   # (1, tile_b)
    o_ref[...] = out.astype(o_ref.dtype)


# ----------------------------------------------------------------------------
# Wrapper
# ----------------------------------------------------------------------------
def _round_up(n, m):
    return ((n + m - 1) // m) * m


def tetris_forward(x, params, *, tile_b=512):
    """x: (B, 4) float32 (PyTorch layout). Returns (B, 1) float32."""
    B, F = x.shape
    assert F == 4, "TetrisNetwork expects 4 input features"

    # Lane-align the tile and clamp it to the (padded) batch; pad the batch so
    # any B works (no divisibility requirement on callers).
    tile_b = max(128, _round_up(min(tile_b, _round_up(B, 128)), 128))
    b_pad = _round_up(B, tile_b)
    grid = (b_pad // tile_b,)

    # Transposed, lane-dense, bf16 input: (4, b_pad). Zero padding is harmless
    # (padded columns are sliced off at the end).
    x_t = jnp.pad(x.astype(jnp.bfloat16).T, ((0, 0), (0, b_pad - B)))

    w1 = params["w1"].astype(jnp.bfloat16)
    w2 = params["w2"].astype(jnp.bfloat16)
    w3 = params["w3"].astype(jnp.bfloat16)
    b1, b2, b3 = params["b1"], params["b2"], params["b3"]

    full = lambda shape: pl.BlockSpec(shape, lambda i: (0, 0))

    flops = 2 * b_pad * (4 * 64 + 64 * 64 + 64 * 1)
    bytes_accessed = (x_t.size * 2 + b_pad * 1 * 4
                      + (w1.size + w2.size + w3.size) * 2
                      + (b1.size + b2.size + b3.size) * 4)

    out_pad = pl.pallas_call(
        tetris_mlp_kernel,
        out_shape=jax.ShapeDtypeStruct((1, b_pad), jnp.float32),
        grid_spec=pltpu.PrefetchScalarGridSpec(
            num_scalar_prefetch=0,
            grid=grid,
            in_specs=[
                pl.BlockSpec((4, tile_b), lambda i: (0, i)),   # x tile (lane-dense)
                full((64, 4)),    # w1
                full((64, 1)),    # b1
                full((64, 64)),   # w2
                full((64, 1)),    # b2
                full((64, 1)),    # w3
                full((1, 1)),     # b3
            ],
            out_specs=pl.BlockSpec((1, tile_b), lambda i: (0, i)),
        ),
        compiler_params=pltpu.CompilerParams(
            dimension_semantics=("parallel",)),   # megacore-shardable on v7x
        cost_estimate=pl.CostEstimate(
            flops=flops, transcendentals=0, bytes_accessed=bytes_accessed),
    )(x_t, w1, b1, w2, b2, w3, b3)

    return out_pad[:, :B].T                       # (B, 1) float32


# ----------------------------------------------------------------------------
# References
# ----------------------------------------------------------------------------
def tetris_forward_ref_bf16(x, params):
    # Mirrors the kernel's dtype flow (bf16 inputs/weights, f32 accumulation).
    f32 = jnp.float32
    xb = x.astype(jnp.bfloat16).astype(f32)
    w1 = params["w1"].astype(jnp.bfloat16).astype(f32)
    w2 = params["w2"].astype(jnp.bfloat16).astype(f32)
    w3 = params["w3"].astype(jnp.bfloat16).astype(f32)
    h = jnp.maximum(xb @ w1.T + params["b1"].T, 0.0)
    h = h.astype(jnp.bfloat16).astype(f32)
    h = jnp.maximum(h @ w2.T + params["b2"].T, 0.0)
    return h @ w3 + params["b3"].T


def tetris_forward_ref_f32(x, params):
    # Pure-f32 PyTorch-equivalent forward.
    h = jnp.maximum(x @ params["w1"].T + params["b1"].T, 0.0)
    h = jnp.maximum(h @ params["w2"].T + params["b2"].T, 0.0)
    return h @ params["w3"] + params["b3"].T


if __name__ == "__main__":
    params = make_params(seed=0)

    key = jax.random.PRNGKey(0)
    B = 200  # deliberately not a multiple of the tile: exercises padding + grid > 1
    x = jax.random.normal(key, (B, 4), dtype=jnp.float32)

    out = tetris_forward(x, params, tile_b=128)
    out = jax.block_until_ready(out)
    assert out.shape == (B, 1)

    ref_bf16 = tetris_forward_ref_bf16(x, params)
    ref_f32 = tetris_forward_ref_f32(x, params)
    assert jnp.allclose(out, ref_bf16, atol=1e-3, rtol=1e-3), "mismatch vs bf16-flow reference"
    assert jnp.allclose(out, ref_f32, atol=5e-2, rtol=5e-2), "mismatch vs f32 reference"

    print("KERNEL_OK")
</pallas_src>

<mosaic_0001>
module attributes {stable_mosaic.version = 11 : i64} {
  func.func @tetris_mlp_kernel(%arg0: i32, %arg1: memref<4x128xbf16, #tpu.memory_space<vmem>>, %arg2: memref<64x4xbf16, #tpu.memory_space<vmem>>, %arg3: memref<64x1xf32, #tpu.memory_space<vmem>>, %arg4: memref<64x64xbf16, #tpu.memory_space<vmem>>, %arg5: memref<64x1xf32, #tpu.memory_space<vmem>>, %arg6: memref<64x1xbf16, #tpu.memory_space<vmem>>, %arg7: memref<1x1xf32, #tpu.memory_space<vmem>>, %arg8: memref<1x128xf32, #tpu.memory_space<vmem>>) attributes {dimension_semantics = [#tpu.dimension_semantics<parallel>], iteration_bounds = array<i64: 2>, scalar_prefetch = 0 : i64, scratch_operands = 0 : i64, tpu.core_type = #tpu.core_type<tc>, window_params = [{transform_indices = @transform_0, window_bounds = array<i64: 4, 128>}, {pipeline_mode = #tpu.pipeline_mode<synchronous>, transform_indices = @transform_1, window_bounds = array<i64: 64, 4>}, {pipeline_mode = #tpu.pipeline_mode<synchronous>, transform_indices = @transform_2, window_bounds = array<i64: 64, 1>}, {pipeline_mode = #tpu.pipeline_mode<synchronous>, transform_indices = @transform_3, window_bounds = array<i64: 64, 64>}, {pipeline_mode = #tpu.pipeline_mode<synchronous>, transform_indices = @transform_4, window_bounds = array<i64: 64, 1>}, {pipeline_mode = #tpu.pipeline_mode<synchronous>, transform_indices = @transform_5, window_bounds = array<i64: 64, 1>}, {pipeline_mode = #tpu.pipeline_mode<synchronous>, transform_indices = @transform_6, window_bounds = array<i64: 1, 1>}, {transform_indices = @transform_7, window_bounds = array<i64: 1, 128>}]} {
    %c0 = arith.constant 0 : index
    %c0_0 = arith.constant 0 : index
    %0 = vector.load %arg1[%c0, %c0_0] : memref<4x128xbf16, #tpu.memory_space<vmem>>, vector<4x128xbf16>
    %1 = arith.extf %0 : vector<4x128xbf16> to vector<4x128xf32>
    %c0_1 = arith.constant 0 : index
    %c0_2 = arith.constant 0 : index
    %2 = vector.load %arg2[%c0_1, %c0_2] : memref<64x4xbf16, #tpu.memory_space<vmem>>, vector<64x4xbf16>
    %3 = arith.extf %2 : vector<64x4xbf16> to vector<64x4xf32>
    %4 = vector.extract_strided_slice %3 {offsets = [0, 0], sizes = [64, 1], strides = [1, 1]} : vector<64x4xf32> to vector<64x1xf32>
    %5 = vector.extract_strided_slice %1 {offsets = [0, 0], sizes = [1, 128], strides = [1, 1]} : vector<4x128xf32> to vector<1x128xf32>
    %6 = vector.broadcast %4 : vector<64x1xf32> to vector<64x128xf32>
    %7 = vector.broadcast %5 : vector<1x128xf32> to vector<64x128xf32>
    %8 = arith.mulf %6, %7 : vector<64x128xf32>
    %9 = vector.extract_strided_slice %3 {offsets = [0, 1], sizes = [64, 1], strides = [1, 1]} : vector<64x4xf32> to vector<64x1xf32>
    %10 = vector.extract_strided_slice %1 {offsets = [1, 0], sizes = [1, 128], strides = [1, 1]} : vector<4x128xf32> to vector<1x128xf32>
    %11 = vector.broadcast %9 : vector<64x1xf32> to vector<64x128xf32>
    %12 = vector.broadcast %10 : vector<1x128xf32> to vector<64x128xf32>
    %13 = arith.mulf %11, %12 : vector<64x128xf32>
    %14 = arith.addf %8, %13 : vector<64x128xf32>
    %15 = vector.extract_strided_slice %3 {offsets = [0, 2], sizes = [64, 1], strides = [1, 1]} : vector<64x4xf32> to vector<64x1xf32>
    %16 = vector.extract_strided_slice %1 {offsets = [2, 0], sizes = [1, 128], strides = [1, 1]} : vector<4x128xf32> to vector<1x128xf32>
    %17 = vector.broadcast %15 : vector<64x1xf32> to vector<64x128xf32>
    %18 = vector.broadcast %16 : vector<1x128xf32> to vector<64x128xf32>
    %19 = arith.mulf %17, %18 : vector<64x128xf32>
    %20 = arith.addf %14, %19 : vector<64x128xf32>
    %21 = vector.extract_strided_slice %3 {offsets = [0, 3], sizes = [64, 1], strides = [1, 1]} : vector<64x4xf32> to vector<64x1xf32>
    %22 = vector.extract_strided_slice %1 {offsets = [3, 0], sizes = [1, 128], strides = [1, 1]} : vector<4x128xf32> to vector<1x128xf32>
    %23 = vector.broadcast %21 : vector<64x1xf32> to vector<64x128xf32>
    %24 = vector.broadcast %22 : vector<1x128xf32> to vector<64x128xf32>
    %25 = arith.mulf %23, %24 : vector<64x128xf32>
    %26 = arith.addf %20, %25 : vector<64x128xf32>
    %c0_3 = arith.constant 0 : index
    %c0_4 = arith.constant 0 : index
    %27 = vector.load %arg3[%c0_3, %c0_4] : memref<64x1xf32, #tpu.memory_space<vmem>>, vector<64x1xf32>
    %28 = vector.broadcast %27 : vector<64x1xf32> to vector<64x128xf32>
    %29 = arith.addf %26, %28 : vector<64x128xf32>
    %cst = arith.constant 0.000000e+00 : f32
    %30 = vector.broadcast %cst : f32 to vector<64x128xf32>
    %31 = arith.maximumf %29, %30 : vector<64x128xf32>
    %32 = arith.truncf %31 : vector<64x128xf32> to vector<64x128xbf16>
    %c0_5 = arith.constant 0 : index
    %c0_6 = arith.constant 0 : index
    %33 = vector.load %arg4[%c0_5, %c0_6] : memref<64x64xbf16, #tpu.memory_space<vmem>>, vector<64x64xbf16>
    %cst_7 = arith.constant dense<0.000000e+00> : vector<64x128xf32>
    %34 = tpu.matmul %33, %32, %cst_7 {dimension_numbers = #tpu.dot_dimension_numbers<[1], [0], [0], [1], [0, 0, 1, 1], [], []>} : vector<64x64xbf16>, vector<64x128xbf16>, vector<64x128xf32> -> vector<64x128xf32>
    %c0_8 = arith.constant 0 : index
    %c0_9 = arith.constant 0 : index
    %35 = vector.load %arg5[%c0_8, %c0_9] : memref<64x1xf32, #tpu.memory_space<vmem>>, vector<64x1xf32>
    %36 = vector.broadcast %35 : vector<64x1xf32> to vector<64x128xf32>
    %37 = arith.addf %34, %36 : vector<64x128xf32>
    %cst_10 = arith.constant 0.000000e+00 : f32
    %38 = vector.broadcast %cst_10 : f32 to vector<64x128xf32>
    %39 = arith.maximumf %37, %38 : vector<64x128xf32>
    %c0_11 = arith.constant 0 : index
    %c0_12 = arith.constant 0 : index
    %40 = vector.load %arg6[%c0_11, %c0_12] : memref<64x1xbf16, #tpu.memory_space<vmem>>, vector<64x1xbf16>
    %41 = arith.extf %40 : vector<64x1xbf16> to vector<64x1xf32>
    %42 = vector.broadcast %41 : vector<64x1xf32> to vector<64x128xf32>
    %43 = arith.mulf %42, %39 : vector<64x128xf32>
    %cst_13 = arith.constant dense<0.000000e+00> : vector<128xf32>
    %44 = vector.multi_reduction <add>, %43, %cst_13 [0] : vector<64x128xf32> to vector<128xf32>
    %45 = vector.shape_cast %44 : vector<128xf32> to vector<1x128xf32>
    %c0_14 = arith.constant 0 : index
    %c0_15 = arith.constant 0 : index
    %46 = vector.load %arg7[%c0_14, %c0_15] : memref<1x1xf32, #tpu.memory_space<vmem>>, vector<1x1xf32>
    %47 = vector.broadcast %46 : vector<1x1xf32> to vector<1x128xf32>
    %48 = arith.addf %45, %47 : vector<1x128xf32>
    %c0_16 = arith.constant 0 : index
    %c0_17 = arith.constant 0 : index
    %49 = vector.load %arg8[%c0_16, %c0_17] : memref<1x128xf32, #tpu.memory_space<vmem>>, vector<1x128xf32>
    tpu.vector_store %arg8[%c0_16, %c0_17], %48 {strides = array<i32>} : memref<1x128xf32, #tpu.memory_space<vmem>>, vector<1x128xf32>,
    return
  }
  func.func @transform_0(%arg0: i32) -> (i32, i32) {
    %c0_i32 = arith.constant 0 : i32
    %c0_i32_0 = arith.constant 0 : i32
    return %c0_i32, %arg0 : i32, i32
  }
  func.func @transform_1(%arg0: i32) -> (i32, i32) {
    %c0_i32 = arith.constant 0 : i32
    %c0_i32_0 = arith.constant 0 : i32
    %c0_i32_1 = arith.constant 0 : i32
    return %c0_i32, %c0_i32_0 : i32, i32
  }
  func.func @transform_2(%arg0: i32) -> (i32, i32) {
    %c0_i32 = arith.constant 0 : i32
    %c0_i32_0 = arith.constant 0 : i32
    %c0_i32_1 = arith.constant 0 : i32
    return %c0_i32, %c0_i32_0 : i32, i32
  }
  func.func @transform_3(%arg0: i32) -> (i32, i32) {
    %c0_i32 = arith.constant 0 : i32
    %c0_i32_0 = arith.constant 0 : i32
    %c0_i32_1 = arith.constant 0 : i32
    return %c0_i32, %c0_i32_0 : i32, i32
  }
  func.func @transform_4(%arg0: i32) -> (i32, i32) {
    %c0_i32 = arith.constant 0 : i32
    %c0_i32_0 = arith.constant 0 : i32
    %c0_i32_1 = arith.constant 0 : i32
    return %c0_i32, %c0_i32_0 : i32, i32
  }
  func.func @transform_5(%arg0: i32) -> (i32, i32) {
    %c0_i32 = arith.constant 0 : i32
    %c0_i32_0 = arith.constant 0 : i32
    %c0_i32_1 = arith.constant 0 : i32
    return %c0_i32, %c0_i32_0 : i32, i32
  }
  func.func @transform_6(%arg0: i32) -> (i32, i32) {
    %c0_i32 = arith.constant 0 : i32
    %c0_i32_0 = arith.constant 0 : i32
    %c0_i32_1 = arith.constant 0 : i32
    return %c0_i32, %c0_i32_0 : i32, i32
  }
  func.func @transform_7(%arg0: i32) -> (i32, i32) {
    %c0_i32 = arith.constant 0 : i32
    %c0_i32_0 = arith.constant 0 : i32
    return %c0_i32, %arg0 : i32, i32
  }
}

</mosaic_0001>

<llo_original>
// kernel: tpu_custom_call.1
$region0: #{tpu_custom_call.1}
  #allocation0 [shape = 'u32[]', space=smem, size = 0x4, offset = 0x4, fixed_abs, tag = 'smem constant byte address 0x4 - core index']
  #allocation1 [shape = 'u32[144,128]{1,0:T(1,128)}', space=vmem, size = 0x12000, scoped, tag = 'internal scratch']
  #allocation2 [shape = 'f32[1,1]{1,0:T(1,128)S(1)}', space=vmem, size = 0x200, scoped, tag = 'scoped memory for tpu_custom_call.1']
  %s0 = inlined_call_operand.vmem [shape: bf16[4,256], index: 0, kind: input, shape index: {}]
  %s1 = inlined_call_operand.vmem [shape: bf16[64,4], index: 1, kind: input, shape index: {}]
  %s2 = inlined_call_operand.vmem [shape: f32[64,1], index: 2, kind: input, shape index: {}]
  %s3 = inlined_call_operand.vmem [shape: bf16[64,64], index: 3, kind: input, shape index: {}]
  %s4 = inlined_call_operand.vmem [shape: f32[64,1], index: 4, kind: input, shape index: {}]
  %s5 = inlined_call_operand.vmem [shape: bf16[64,1], index: 5, kind: input, shape index: {}]
  %s6 = inlined_call_operand.<no memory space> [shape: f32[1,1], index: 6, kind: input, shape index: {}]
  %s7 = inlined_call_operand.hbm [shape: f32[1,256], index: 7, kind: output, shape index: {}]
  %s8 = sld [smem:[#allocation0]]
  $region61: #{tpu_custom_call.1} parent=0
    _
  %s10 = ssub.s32 1, %s8
  %s11 = scalar_select 0, %s10, %s8
  %v12 = vstv %s6
  %13 = vst [vmem:[#allocation2] sm:$0x1] %v12
  $region1: #{tpu_custom_call.1} parent=0
    #allocation3 [shape = 'u8[1024]{0}', space=vmem, size = 0x400, scoped, tag = 'output window, operand 0']
    #allocation4 [shape = 's32[2]{0}', space=sflag, size = 0x8, scoped, tag = 'scoped memory for tpu_custom_call.1']
    %14 = vsyncpa [#allocation4], 0
    %s15 = scalar_lea.sflag [#allocation4], 1
    %16 = vsyncpa %s15, 0
    loop: start=0, step=1, limit=4
    $region2: #{tpu_custom_call.1} parent=1 // loop_pre_header
      _
    $region3: #{tpu_custom_call.1} parent=1 // loop_header
      %s18 = sphi 0, %s22
      %p19 = scmp.ge.s32.totalorder %s18, 4
      %s28 = sphi 0, %s30
      %s31 = sphi 0, %s28
      %s32 = sphi 0, %s31
      %s48 = sphi 0, %s32
      %s52 = sphi 0, %s52
      %s54 = sphi 0, %s52
      %s55 = sphi 0, %s54
      %s69 = sphi 0, %s55
      %s73 = sphi 0, %s73
      %s75 = sphi 0, %s73
      %s76 = sphi 0, %s75
      %s90 = sphi 0, %s76
      %s94 = sphi 0, %s94
      %s96 = sphi 0, %s94
      %s97 = sphi 0, %s96
      %s111 = sphi 0, %s97
      %s115 = sphi 0, %s115
      %s117 = sphi 0, %s115
      %s118 = sphi 0, %s117
      %s132 = sphi 0, %s118
      %s136 = sphi 0, %s136
      %s138 = sphi 0, %s136
      %s139 = sphi 0, %s138
      %s153 = sphi 0, %s139
      %s157 = sphi 0, %s157
      %s159 = sphi 0, %s157
      %s160 = sphi 0, %s159
      %s174 = sphi 0, %s160
      %s180 = sphi 0, %s182
      %s183 = sphi 0, %s180
      %s184 = sphi 0, %s183
      %s200 = sphi 0, %s184
    $region4: #{tpu_custom_call.1} parent=1 // loop_header_branch
      %21 = sbr.rel (%p19) target = $region8
    $region5: #{tpu_custom_call.1} parent=1 // loop_body
      %s23 = ssub.s32 %s18, 1
      %s24 = ssub.s32 %s18, 2
      %s25 = sadd.s32 %s18, 1
      %s26 = ssub.s32 %s18, %s25
      %p27 = scmp.eq.s32.totalorder %s26, 0
      %s29 = sadd.s32 %s28, 1
      %s30 = scalar_select %p27, %s28, %s29
      %p33 = pneg %p27
      %p34 = scmp.eq.s32.totalorder %s18, 1
      %p35 = por %p33, %p34
      %p36 = scmp.ne.s32.totalorder %s28, %s31
      %p37 = scmp.eq.s32.totalorder %s18, 0
      %p38 = por %p36, %p37
      %p39 = scmp.ne.s32.totalorder %s28, %s31
      %p40 = scmp.eq.s32.totalorder %s23, 1
      %p41 = por %p39, %p40
      %p42 = scmp.ne.s32.totalorder %s31, %s32
      %p43 = scmp.eq.s32.totalorder %s23, 0
      %p44 = por %p42, %p43
      %p45 = scmp.ne.s32.totalorder %s31, %s32
      %p46 = scmp.eq.s32.totalorder %s24, 1
      %p47 = por %p45, %p46
      %p49 = scmp.ne.s32.totalorder %s32, %s48
      %p50 = scmp.eq.s32.totalorder %s24, 0
      %p51 = por %p49, %p50
      %s53 = sadd.s32 %s52, 1
      %p56 = scmp.eq.s32.totalorder %s18, 1
      %p57 = scmp.ne.s32.totalorder %s52, %s54
      %p58 = scmp.eq.s32.totalorder %s18, 0
      %p59 = por %p57, %p58
      %p60 = scmp.ne.s32.totalorder %s52, %s54
      %p61 = scmp.eq.s32.totalorder %s23, 1
      %p62 = por %p60, %p61
      %p63 = scmp.ne.s32.totalorder %s54, %s55
      %p64 = scmp.eq.s32.totalorder %s23, 0
      %p65 = por %p63, %p64
      %p66 = scmp.ne.s32.totalorder %s54, %s55
      %p67 = scmp.eq.s32.totalorder %s24, 1
      %p68 = por %p66, %p67
      %p70 = scmp.ne.s32.totalorder %s55, %s69
      %p71 = scmp.eq.s32.totalorder %s24, 0
      %p72 = por %p70, %p71
      %s74 = sadd.s32 %s73, 1
      %p77 = scmp.eq.s32.totalorder %s18, 1
      %p78 = scmp.ne.s32.totalorder %s73, %s75
      %p79 = scmp.eq.s32.totalorder %s18, 0
      %p80 = por %p78, %p79
      %p81 = scmp.ne.s32.totalorder %s73, %s75
      %p82 = scmp.eq.s32.totalorder %s23, 1
      %p83 = por %p81, %p82
      %p84 = scmp.ne.s32.totalorder %s75, %s76
      %p85 = scmp.eq.s32.totalorder %s23, 0
      %p86 = por %p84, %p85
      %p87 = scmp.ne.s32.totalorder %s75, %s76
      %p88 = scmp.eq.s32.totalorder %s24, 1
      %p89 = por %p87, %p88
      %p91 = scmp.ne.s32.totalorder %s76, %s90
      %p92 = scmp.eq.s32.totalorder %s24, 0
      %p93 = por %p91, %p92
      %s95 = sadd.s32 %s94, 1
      %p98 = scmp.eq.s32.totalorder %s18, 1
      %p99 = scmp.ne.s32.totalorder %s94, %s96
      %p100 = scmp.eq.s32.totalorder %s18, 0
      %p101 = por %p99, %p100
      %p102 = scmp.ne.s32.totalorder %s94, %s96
      %p103 = scmp.eq.s32.totalorder %s23, 1
      %p104 = por %p102, %p103
      %p105 = scmp.ne.s32.totalorder %s96, %s97
      %p106 = scmp.eq.s32.totalorder %s23, 0
      %p107 = por %p105, %p106
      %p108 = scmp.ne.s32.totalorder %s96, %s97
      %p109 = scmp.eq.s32.totalorder %s24, 1
      %p110 = por %p108, %p109
      %p112 = scmp.ne.s32.totalorder %s97, %s111
      %p113 = scmp.eq.s32.totalorder %s24, 0
      %p114 = por %p112, %p113
      %s116 = sadd.s32 %s115, 1
      %p119 = scmp.eq.s32.totalorder %s18, 1
      %p120 = scmp.ne.s32.totalorder %s115, %s117
      %p121 = scmp.eq.s32.totalorder %s18, 0
      %p122 = por %p120, %p121
      %p123 = scmp.ne.s32.totalorder %s115, %s117
      %p124 = scmp.eq.s32.totalorder %s23, 1
      %p125 = por %p123, %p124
      %p126 = scmp.ne.s32.totalorder %s117, %s118
      %p127 = scmp.eq.s32.totalorder %s23, 0
      %p128 = por %p126, %p127
      %p129 = scmp.ne.s32.totalorder %s117, %s118
      %p130 = scmp.eq.s32.totalorder %s24, 1
      %p131 = por %p129, %p130
      %p133 = scmp.ne.s32.totalorder %s118, %s132
      %p134 = scmp.eq.s32.totalorder %s24, 0
      %p135 = por %p133, %p134
      %s137 = sadd.s32 %s136, 1
      %p140 = scmp.eq.s32.totalorder %s18, 1
      %p141 = scmp.ne.s32.totalorder %s136, %s138
      %p142 = scmp.eq.s32.totalorder %s18, 0
      %p143 = por %p141, %p142
      %p144 = scmp.ne.s32.totalorder %s136, %s138
      %p145 = scmp.eq.s32.totalorder %s23, 1
      %p146 = por %p144, %p145
      %p147 = scmp.ne.s32.totalorder %s138, %s139
      %p148 = scmp.eq.s32.totalorder %s23, 0
      %p149 = por %p147, %p148
      %p150 = scmp.ne.s32.totalorder %s138, %s139
      %p151 = scmp.eq.s32.totalorder %s24, 1
      %p152 = por %p150, %p151
      %p154 = scmp.ne.s32.totalorder %s139, %s153
      %p155 = scmp.eq.s32.totalorder %s24, 0
      %p156 = por %p154, %p155
      %s158 = sadd.s32 %s157, 1
      %p161 = scmp.eq.s32.totalorder %s18, 1
      %p162 = scmp.ne.s32.totalorder %s157, %s159
      %p163 = scmp.eq.s32.totalorder %s18, 0
      %p164 = por %p162, %p163
      %p165 = scmp.ne.s32.totalorder %s157, %s159
      %p166 = scmp.eq.s32.totalorder %s23, 1
      %p167 = por %p165, %p166
      %p168 = scmp.ne.s32.totalorder %s159, %s160
      %p169 = scmp.eq.s32.totalorder %s23, 0
      %p170 = por %p168, %p169
      %p171 = scmp.ne.s32.totalorder %s159, %s160
      %p172 = scmp.eq.s32.totalorder %s24, 1
      %p173 = por %p171, %p172
      %p175 = scmp.ne.s32.totalorder %s160, %s174
      %p176 = scmp.eq.s32.totalorder %s24, 0
      %p177 = por %p175, %p176
      %s178 = ssub.s32 %s18, %s25
      %p179 = scmp.eq.s32.totalorder %s178, 0
      %s181 = sadd.s32 %s180, 1
      %s182 = scalar_select %p179, %s180, %s181
      %p185 = pneg %p179
      %p186 = scmp.eq.s32.totalorder %s18, 1
      %p187 = por %p185, %p186
      %p188 = scmp.ne.s32.totalorder %s180, %s183
      %p189 = scmp.eq.s32.totalorder %s18, 0
      %p190 = por %p188, %p189
      %p191 = scmp.ne.s32.totalorder %s180, %s183
      %p192 = scmp.eq.s32.totalorder %s23, 1
      %p193 = por %p191, %p192
      %p194 = scmp.ne.s32.totalorder %s183, %s184
      %p195 = scmp.eq.s32.totalorder %s23, 0
      %p196 = por %p194, %p195
      %p197 = scmp.ne.s32.totalorder %s183, %s184
      %p198 = scmp.eq.s32.totalorder %s24, 1
      %p199 = por %p197, %p198
      %p201 = scmp.ne.s32.totalorder %s184, %s200
      %p202 = scmp.eq.s32.totalorder %s24, 0
      %p203 = por %p201, %p202
      %p204 = scmp.le.s32.totalorder 1, %s18
      %p205 = scmp.lt.s32.totalorder %s18, 3
      %p206 = pnand %p204, %p205
      %p207 = pneg %p206
      // Predicated region
      $region9: #{tpu_custom_call.1} parent=5 // pred_check
        _
      $region10: #{tpu_custom_call.1} parent=5 // pred_check_branch
        %209 = sbr.rel (%p206) target = $region12
      $region11: #{tpu_custom_call.1} parent=5 // pred_region
        %s210 = ssub.s32 %s18, 1
        // Predicated region
        $region13: #{tpu_custom_call.1} parent=11 // pred_check
          %p211 = pneg %p65
        $region14: #{tpu_custom_call.1} parent=11 // pred_check_branch
          %213 = sbr.rel (%p211) target = $region16
        $region15: #{tpu_custom_call.1} parent=11 // pred_region
          _
        $region16: #{tpu_custom_call.1} parent=11 // pred_fallthru
          _
        // Predicated region
        $region17: #{tpu_custom_call.1} parent=11 // pred_check
          %p214 = pneg %p86
        $region18: #{tpu_custom_call.1} parent=11 // pred_check_branch
          %216 = sbr.rel (%p214) target = $region20
        $region19: #{tpu_custom_call.1} parent=11 // pred_region
          _
        $region20: #{tpu_custom_call.1} parent=11 // pred_fallthru
          _
        // Predicated region
        $region21: #{tpu_custom_call.1} parent=11 // pred_check
          %p217 = pneg %p107
        $region22: #{tpu_custom_call.1} parent=11 // pred_check_branch
          %219 = sbr.rel (%p217) target = $region24
        $region23: #{tpu_custom_call.1} parent=11 // pred_region
          _
        $region24: #{tpu_custom_call.1} parent=11 // pred_fallthru
          _
        // Predicated region
        $region25: #{tpu_custom_call.1} parent=11 // pred_check
          %p220 = pneg %p128
        $region26: #{tpu_custom_call.1} parent=11 // pred_check_branch
          %222 = sbr.rel (%p220) target = $region28
        $region27: #{tpu_custom_call.1} parent=11 // pred_region
          _
        $region28: #{tpu_custom_call.1} parent=11 // pred_fallthru
          _
        // Predicated region
        $region29: #{tpu_custom_call.1} parent=11 // pred_check
          %p223 = pneg %p149
        $region30: #{tpu_custom_call.1} parent=11 // pred_check_branch
          %225 = sbr.rel (%p223) target = $region32
        $region31: #{tpu_custom_call.1} parent=11 // pred_region
          _
        $region32: #{tpu_custom_call.1} parent=11 // pred_fallthru
          _
        // Predicated region
        $region33: #{tpu_custom_call.1} parent=11 // pred_check
          %p226 = pneg %p170
        $region34: #{tpu_custom_call.1} parent=11 // pred_check_branch
          %228 = sbr.rel (%p226) target = $region36
        $region35: #{tpu_custom_call.1} parent=11 // pred_region
          _
        $region36: #{tpu_custom_call.1} parent=11 // pred_fallthru
          _
      $region12: #{tpu_custom_call.1} parent=5 // pred_fallthru
        _
      %p229 = scmp.lt.s32.totalorder %s18, 2
      // Predicated region
      $region37: #{tpu_custom_call.1} parent=5 // pred_check
        %p230 = pneg %p229
      $region38: #{tpu_custom_call.1} parent=5 // pred_check_branch
        %232 = sbr.rel (%p230) target = $region40
      $region39: #{tpu_custom_call.1} parent=5 // pred_region
        // Predicated region
        $region41: #{tpu_custom_call.1} parent=39 // pred_check
          %p233 = pneg %p38
        $region42: #{tpu_custom_call.1} parent=39 // pred_check_branch
          %235 = sbr.rel (%p233) target = $region44
        $region43: #{tpu_custom_call.1} parent=39 // pred_region
          %p236 = scmp.lt.s32.totalorder %s18, 1
          %s237 = scalar_select %p236, %s18, 1
          %s238 = smul.addr %s237, 2
          %s239 = scalar_lea.vmem %s0, %s238
        $region44: #{tpu_custom_call.1} parent=39 // pred_fallthru
          _
      $region40: #{tpu_custom_call.1} parent=5 // pred_fallthru
        _
      %p240 = scmp.le.s32.totalorder 1, %s18
      %p241 = scmp.lt.s32.totalorder %s18, 3
      %p242 = pnand %p240, %p241
      %p243 = pneg %p242
      // Predicated region
      $region45: #{tpu_custom_call.1} parent=5 // pred_check
        _
      $region46: #{tpu_custom_call.1} parent=5 // pred_check_branch
        %245 = sbr.rel (%p242) target = $region48
      $region47: #{tpu_custom_call.1} parent=5 // pred_region
        %s246 = ssub.s32 %s18, 1
        %p247 = scmp.lt.s32.totalorder %s23, 1
        %s248 = scalar_select %p247, %s23, 1
        %s249 = smul.addr %s248, 2
        %s250 = scalar_lea.vmem %s0, %s249
        %p251 = pneg %p44
        %p252 = pneg %p41
        %p253 = pneg %p65
        %p254 = pneg %p62
        %p255 = pneg %p86
        %p256 = pneg %p83
        %p257 = pneg %p107
        %p258 = pneg %p104
        %p259 = pneg %p128
        %p260 = pneg %p125
        %p261 = pneg %p149
        %p262 = pneg %p146
        %p263 = pneg %p170
        %p264 = pneg %p167
        %p265 = pneg %p196
        %p266 = pneg %p193
        %s267 = sand.u32 %s183, 1
        %s268 = scalar_lea.sflag [#allocation4], %s267
        %s269 = sand.u32 %s183, 1
        %s270 = scalar_lea.vmem [#allocation3], %s269
        %p271 = scmp.lt.s32.totalorder %s23, 1
        %s272 = scalar_select %p271, %s23, 1
        %s273 = smul.addr %s272, 2
        %s274 = scalar_lea.vmem %s0, %s273
        %v276 = vld [vmem:[%s274] sm:$0x3]
        %v277 = vunpack.c.l.bf16 %v276
        %v278 = vld [vmem:[%s1] sm:$0xf]
        %v279 = vld [vmem:[%s1 + $0x4] sm:$0xf]
        %v280 = vld [vmem:[%s1 + $0x8] sm:$0xf]
        %v281 = vld [vmem:[%s1 + $0xc] sm:$0xf]
        %v282 = vld [vmem:[%s1 + $0x10] sm:$0xf]
        %v283 = vld [vmem:[%s1 + $0x14] sm:$0xf]
        %v284 = vld [vmem:[%s1 + $0x18] sm:$0xf]
        %v285 = vld [vmem:[%s1 + $0x1c] sm:$0xf]
        %v286 = vunpack.c.l.bf16 %v278
        %v287 = vunpack.c.l.bf16 %v279
        %v288 = vunpack.c.l.bf16 %v280
        %v289 = vunpack.c.l.bf16 %v281
        %v290 = vunpack.c.l.bf16 %v282
        %v291 = vunpack.c.l.bf16 %v283
        %v292 = vunpack.c.l.bf16 %v284
        %v293 = vunpack.c.l.bf16 %v285
        %295 = vset.pattern.permute.xlu0 0
        %296 = vperm.xlu0 %295, %v286
        %v297 = vpop.permute.xlu0 %296
        %300 = vset.pattern.permute.xlu0 0
        %301 = vperm.xlu0 %300, %v287
        %v302 = vpop.permute.xlu0 %301
        %305 = vset.pattern.permute.xlu0 0
        %306 = vperm.xlu0 %305, %v288
        %v307 = vpop.permute.xlu0 %306
        %310 = vset.pattern.permute.xlu0 0
        %311 = vperm.xlu0 %310, %v289
        %v312 = vpop.permute.xlu0 %311
        %315 = vset.pattern.permute.xlu0 0
        %316 = vperm.xlu0 %315, %v290
        %v317 = vpop.permute.xlu0 %316
        %320 = vset.pattern.permute.xlu0 0
        %321 = vperm.xlu0 %320, %v291
        %v322 = vpop.permute.xlu0 %321
        %325 = vset.pattern.permute.xlu0 0
        %326 = vperm.xlu0 %325, %v292
        %v327 = vpop.permute.xlu0 %326
        %330 = vset.pattern.permute.xlu0 0
        %331 = vperm.xlu0 %330, %v293
        %v332 = vpop.permute.xlu0 %331
        %v334 = vlaneseq
        %v335 = vshrl.u32 %v334, 7
        %v336 = vsub.s32 0, %v335
        %v337 = vrot.slane %v277, %v336
        %v338 = vmul.f32 %v297, %v337
        %v339 = vmul.f32 %v302, %v337
        %v340 = vmul.f32 %v307, %v337
        %v341 = vmul.f32 %v312, %v337
        %v342 = vmul.f32 %v317, %v337
        %v343 = vmul.f32 %v322, %v337
        %v344 = vmul.f32 %v327, %v337
        %v345 = vmul.f32 %v332, %v337
        %346 = vset.pattern.permute.xlu0 1
        %347 = vperm.xlu0 %346, %v286
        %v348 = vpop.permute.xlu0 %347
        %350 = vset.pattern.permute.xlu0 1
        %351 = vperm.xlu0 %350, %v287
        %v352 = vpop.permute.xlu0 %351
        %354 = vset.pattern.permute.xlu0 1
        %355 = vperm.xlu0 %354, %v288
        %v356 = vpop.permute.xlu0 %355
        %358 = vset.pattern.permute.xlu0 1
        %359 = vperm.xlu0 %358, %v289
        %v360 = vpop.permute.xlu0 %359
        %362 = vset.pattern.permute.xlu0 1
        %363 = vperm.xlu0 %362, %v290
        %v364 = vpop.permute.xlu0 %363
        %366 = vset.pattern.permute.xlu0 1
        %367 = vperm.xlu0 %366, %v291
        %v368 = vpop.permute.xlu0 %367
        %370 = vset.pattern.permute.xlu0 1
        %371 = vperm.xlu0 %370, %v292
        %v372 = vpop.permute.xlu0 %371
        %374 = vset.pattern.permute.xlu0 1
        %375 = vperm.xlu0 %374, %v293
        %v376 = vpop.permute.xlu0 %375
        %v378 = vlaneseq
        %v379 = vshrl.u32 %v378, 7
        %v380 = vsub.s32 1, %v379
        %v381 = vrot.slane %v277, %v380
        %v382 = vmul.f32 %v348, %v381
        %v383 = vmul.f32 %v352, %v381
        %v384 = vmul.f32 %v356, %v381
        %v385 = vmul.f32 %v360, %v381
        %v386 = vmul.f32 %v364, %v381
        %v387 = vmul.f32 %v368, %v381
        %v388 = vmul.f32 %v372, %v381
        %v389 = vmul.f32 %v376, %v381
        %v390 = vadd.f32 %v338, %v382
        %v391 = vadd.f32 %v339, %v383
        %v392 = vadd.f32 %v340, %v384
        %v393 = vadd.f32 %v341, %v385
        %v394 = vadd.f32 %v342, %v386
        %v395 = vadd.f32 %v343, %v387
        %v396 = vadd.f32 %v344, %v388
        %v397 = vadd.f32 %v345, %v389
        %398 = vset.pattern.permute.xlu0 2
        %399 = vperm.xlu0 %398, %v286
        %v400 = vpop.permute.xlu0 %399
        %402 = vset.pattern.permute.xlu0 2
        %403 = vperm.xlu0 %402, %v287
        %v404 = vpop.permute.xlu0 %403
        %406 = vset.pattern.permute.xlu0 2
        %407 = vperm.xlu0 %406, %v288
        %v408 = vpop.permute.xlu0 %407
        %410 = vset.pattern.permute.xlu0 2
        %411 = vperm.xlu0 %410, %v289
        %v412 = vpop.permute.xlu0 %411
        %414 = vset.pattern.permute.xlu0 2
        %415 = vperm.xlu0 %414, %v290
        %v416 = vpop.permute.xlu0 %415
        %418 = vset.pattern.permute.xlu0 2
        %419 = vperm.xlu0 %418, %v291
        %v420 = vpop.permute.xlu0 %419
        %422 = vset.pattern.permute.xlu0 2
        %423 = vperm.xlu0 %422, %v292
        %v424 = vpop.permute.xlu0 %423
        %426 = vset.pattern.permute.xlu0 2
        %427 = vperm.xlu0 %426, %v293
        %v428 = vpop.permute.xlu0 %427
        %v430 = vlaneseq
        %v431 = vshrl.u32 %v430, 7
        %v432 = vsub.s32 2, %v431
        %v433 = vrot.slane %v277, %v432
        %v434 = vmul.f32 %v400, %v433
        %v435 = vmul.f32 %v404, %v433
        %v436 = vmul.f32 %v408, %v433
        %v437 = vmul.f32 %v412, %v433
        %v438 = vmul.f32 %v416, %v433
        %v439 = vmul.f32 %v420, %v433
        %v440 = vmul.f32 %v424, %v433
        %v441 = vmul.f32 %v428, %v433
        %v442 = vadd.f32 %v390, %v434
        %v443 = vadd.f32 %v391, %v435
        %v444 = vadd.f32 %v392, %v436
        %v445 = vadd.f32 %v393, %v437
        %v446 = vadd.f32 %v394, %v438
        %v447 = vadd.f32 %v395, %v439
        %v448 = vadd.f32 %v396, %v440
        %v449 = vadd.f32 %v397, %v441
        %450 = vset.pattern.permute.xlu0 3
        %451 = vperm.xlu0 %450, %v286
        %v452 = vpop.permute.xlu0 %451
        %454 = vset.pattern.permute.xlu0 3
        %455 = vperm.xlu0 %454, %v287
        %v456 = vpop.permute.xlu0 %455
        %458 = vset.pattern.permute.xlu0 3
        %459 = vperm.xlu0 %458, %v288
        %v460 = vpop.permute.xlu0 %459
        %462 = vset.pattern.permute.xlu0 3
        %463 = vperm.xlu0 %462, %v289
        %v464 = vpop.permute.xlu0 %463
        %466 = vset.pattern.permute.xlu0 3
        %467 = vperm.xlu0 %466, %v290
        %v468 = vpop.permute.xlu0 %467
        %470 = vset.pattern.permute.xlu0 3
        %471 = vperm.xlu0 %470, %v291
        %v472 = vpop.permute.xlu0 %471
        %474 = vset.pattern.permute.xlu0 3
        %475 = vperm.xlu0 %474, %v292
        %v476 = vpop.permute.xlu0 %475
        %478 = vset.pattern.permute.xlu0 3
        %479 = vperm.xlu0 %478, %v293
        %v480 = vpop.permute.xlu0 %479
        %v482 = vlaneseq
        %v483 = vshrl.u32 %v482, 7
        %v484 = vsub.s32 3, %v483
        %v485 = vrot.slane %v277, %v484
        %v486 = vmul.f32 %v452, %v485
        %v487 = vmul.f32 %v456, %v485
        %v488 = vmul.f32 %v460, %v485
        %v489 = vmul.f32 %v464, %v485
        %v490 = vmul.f32 %v468, %v485
        %v491 = vmul.f32 %v472, %v485
        %v492 = vmul.f32 %v476, %v485
        %v493 = vmul.f32 %v480, %v485
        %v494 = vadd.f32 %v442, %v486
        %v495 = vadd.f32 %v443, %v487
        %v496 = vadd.f32 %v444, %v488
        %v497 = vadd.f32 %v445, %v489
        %v498 = vadd.f32 %v446, %v490
        %v499 = vadd.f32 %v447, %v491
        %v500 = vadd.f32 %v448, %v492
        %v501 = vadd.f32 %v449, %v493
        %v502 = vld [vmem:[%s2] sm:$0xff]
        %v503 = vld [vmem:[%s2 + $0x8] sm:$0xff]
        %v504 = vld [vmem:[%s2 + $0x10] sm:$0xff]
        %v505 = vld [vmem:[%s2 + $0x18] sm:$0xff]
        %v506 = vld [vmem:[%s2 + $0x20] sm:$0xff]
        %v507 = vld [vmem:[%s2 + $0x28] sm:$0xff]
        %v508 = vld [vmem:[%s2 + $0x30] sm:$0xff]
        %v509 = vld [vmem:[%s2 + $0x38] sm:$0xff]
        %511 = vset.pattern.permute.xlu0 0
        %512 = vperm.xlu0 %511, %v502
        %v513 = vpop.permute.xlu0 %512
        %516 = vset.pattern.permute.xlu0 0
        %517 = vperm.xlu0 %516, %v503
        %v518 = vpop.permute.xlu0 %517
        %521 = vset.pattern.permute.xlu0 0
        %522 = vperm.xlu0 %521, %v504
        %v523 = vpop.permute.xlu0 %522
        %526 = vset.pattern.permute.xlu0 0
        %527 = vperm.xlu0 %526, %v505
        %v528 = vpop.permute.xlu0 %527
        %531 = vset.pattern.permute.xlu0 0
        %532 = vperm.xlu0 %531, %v506
        %v533 = vpop.permute.xlu0 %532
        %536 = vset.pattern.permute.xlu0 0
        %537 = vperm.xlu0 %536, %v507
        %v538 = vpop.permute.xlu0 %537
        %541 = vset.pattern.permute.xlu0 0
        %542 = vperm.xlu0 %541, %v508
        %v543 = vpop.permute.xlu0 %542
        %546 = vset.pattern.permute.xlu0 0
        %547 = vperm.xlu0 %546, %v509
        %v548 = vpop.permute.xlu0 %547
        %v550 = vadd.f32 %v494, %v513
        %v551 = vadd.f32 %v495, %v518
        %v552 = vadd.f32 %v496, %v523
        %v553 = vadd.f32 %v497, %v528
        %v554 = vadd.f32 %v498, %v533
        %v555 = vadd.f32 %v499, %v538
        %v556 = vadd.f32 %v500, %v543
        %v557 = vadd.f32 %v501, %v548
        %v558 = vmax.f32 %v550, 0.0
        %v559 = vmax.f32 %v551, 0.0
        %v560 = vmax.f32 %v552, 0.0
        %v561 = vmax.f32 %v553, 0.0
        %v562 = vmax.f32 %v554, 0.0
        %v563 = vmax.f32 %v555, 0.0
        %v564 = vmax.f32 %v556, 0.0
        %v565 = vmax.f32 %v557, 0.0
        %v566 = vpack.c.bf16 %v559, %v558
        %v567 = vpack.c.bf16 %v561, %v560
        %v568 = vpack.c.bf16 %v563, %v562
        %v569 = vpack.c.bf16 %v565, %v564
        %v570 = vld [vmem:[%s3] sm:$0xf]
        %v571 = vld [vmem:[%s3 + $0x4] sm:$0xf]
        %v572 = vld [vmem:[%s3 + $0x8] sm:$0xf]
        %v573 = vld [vmem:[%s3 + $0xc] sm:$0xf]
        %v574 = vld [vmem:[%s3 + $0x10] sm:$0xf]
        %v575 = vld [vmem:[%s3 + $0x14] sm:$0xf]
        %v576 = vld [vmem:[%s3 + $0x18] sm:$0xf]
        %v577 = vld [vmem:[%s3 + $0x1c] sm:$0xf]
        %v578 = vld [vmem:[%s4] sm:$0xff]
        %v579 = vld [vmem:[%s4 + $0x8] sm:$0xff]
        %v580 = vld [vmem:[%s4 + $0x10] sm:$0xff]
        %v581 = vld [vmem:[%s4 + $0x18] sm:$0xff]
        %v582 = vld [vmem:[%s4 + $0x20] sm:$0xff]
        %v583 = vld [vmem:[%s4 + $0x28] sm:$0xff]
        %v584 = vld [vmem:[%s4 + $0x30] sm:$0xff]
        %v585 = vld [vmem:[%s4 + $0x38] sm:$0xff]
        %587 = vset.pattern.permute.xlu0 0
        %588 = vperm.xlu0 %587, %v578
        %v589 = vpop.permute.xlu0 %588
        %592 = vset.pattern.permute.xlu0 0
        %593 = vperm.xlu0 %592, %v579
        %v594 = vpop.permute.xlu0 %593
        %597 = vset.pattern.permute.xlu0 0
        %598 = vperm.xlu0 %597, %v580
        %v599 = vpop.permute.xlu0 %598
        %602 = vset.pattern.permute.xlu0 0
        %603 = vperm.xlu0 %602, %v581
        %v604 = vpop.permute.xlu0 %603
        %607 = vset.pattern.permute.xlu0 0
        %608 = vperm.xlu0 %607, %v582
        %v609 = vpop.permute.xlu0 %608
        %612 = vset.pattern.permute.xlu0 0
        %613 = vperm.xlu0 %612, %v583
        %v614 = vpop.permute.xlu0 %613
        %617 = vset.pattern.permute.xlu0 0
        %618 = vperm.xlu0 %617, %v584
        %v619 = vpop.permute.xlu0 %618
        %622 = vset.pattern.permute.xlu0 0
        %623 = vperm.xlu0 %622, %v585
        %v624 = vpop.permute.xlu0 %623
        %v634 = vunpack.c.l.b16 %v570
        %v635 = vunpack.c.l.b16 %v571
        %v636 = vunpack.c.l.b16 %v572
        %v637 = vunpack.c.l.b16 %v573
        %v638 = vunpack.c.l.b16 %v574
        %v639 = vunpack.c.l.b16 %v575
        %v640 = vunpack.c.l.b16 %v576
        %v641 = vunpack.c.l.b16 %v577
        %v642 = vpack.c.b16 %v635, %v634
        %v643 = vpack.c.b16 %v637, %v636
        %v644 = vpack.c.b16 %v639, %v638
        %v645 = vpack.c.b16 %v641, %v640
        %vm646 = vcmask 523264
        %v648 = vsel %vm646, %v642, 0
        %v651 = vsel %vm646, %v643, 0
        %v654 = vsel %vm646, %v644, 0
        %v657 = vsel %vm646, %v645, 0
        %659 = vmatprep.subr.bf16.mxu0 0
        %660 = vmatpush1.bf16.msra.mxu0 %v566
        %661 = vmatprep.subr.bf16.mxu0 0
        %662 = vmatpush1.bf16.msra.mxu0 %v567
        %663 = vmatprep.subr.bf16.mxu0 0
        %664 = vmatpush1.bf16.msra.mxu0 %v568
        %665 = vmatprep.subr.bf16.mxu0 0
        %666 = vmatpush1.bf16.msra.mxu0 %v569
        %667 = vmatprep.subr.bf16.mxu0 0
        %668 = vmatpush1.bf16.msra.mxu0 0
        %669 = vmatprep.subr.bf16.mxu0 0
        %670 = vmatpush1.bf16.msra.mxu0 0
        %671 = vmatprep.subr.bf16.mxu0 0
        %672 = vmatpush1.bf16.msra.mxu0 0
        %673 = vmatprep.subr.bf16.mxu0 0
        %674 = vmatpush1.bf16.msra.mxu0 0
        %675 = vmatprep.subr.bf16.mxu0 0
        %676 = vmatpush1.bf16.msra.mxu0 0
        %677 = vmatprep.subr.bf16.mxu0 0
        %678 = vmatpush1.bf16.msra.mxu0 0
        %679 = vmatprep.subr.bf16.mxu0 0
        %680 = vmatpush1.bf16.msra.mxu0 0
        %681 = vmatprep.subr.bf16.mxu0 0
        %682 = vmatpush1.bf16.msra.mxu0 0
        %683 = vmatprep.subr.bf16.mxu0 0
        %684 = vmatpush1.bf16.msra.mxu0 0
        %685 = vmatprep.subr.bf16.mxu0 0
        %686 = vmatpush1.bf16.msra.mxu0 0
        %687 = vmatprep.subr.bf16.mxu0 0
        %688 = vmatpush1.bf16.msra.mxu0 0
        %689 = vmatprep.subr.bf16.mxu0 0
        %690 = vmatpush1.bf16.msra.mxu0 0
        %691 = vmatprep.mubr.bf16.mxu0 0
        %692 = vmatmul.mubr.bf16.gmra.mrb[0].mxu0 %v648
        %v693 = vpop.f32.mrb[0].mxu0
        %v694 = vadd.f32 %v589, %v693
        %v695 = vpop.f32.mrb[0].mxu0
        %v696 = vpop.f32.mrb[0].mxu0
        %v697 = vadd.f32 %v594, %v696
        %v698 = vpop.f32.mrb[0].mxu0
        %699 = vmatprep.mubr.bf16.mxu0 0
        %700 = vmatmul.mubr.bf16.gmra.mrb[0].mxu0 %v651
        %v701 = vpop.f32.mrb[0].mxu0
        %v702 = vadd.f32 %v599, %v701
        %v703 = vpop.f32.mrb[0].mxu0
        %v704 = vpop.f32.mrb[0].mxu0
        %v705 = vadd.f32 %v604, %v704
        %v706 = vpop.f32.mrb[0].mxu0
        %707 = vmatprep.mubr.bf16.mxu0 0
        %708 = vmatmul.mubr.bf16.gmra.mrb[0].mxu0 %v654
        %v709 = vpop.f32.mrb[0].mxu0
        %v710 = vadd.f32 %v609, %v709
        %v711 = vpop.f32.mrb[0].mxu0
        %v712 = vpop.f32.mrb[0].mxu0
        %v713 = vadd.f32 %v614, %v712
        %v714 = vpop.f32.mrb[0].mxu0
        %715 = vmatprep.mubr.bf16.mxu0 0
        %716 = vmatmul.mubr.bf16.gmra.mrb[0].mxu0 %v657
        %v717 = vpop.f32.mrb[0].mxu0
        %v718 = vadd.f32 %v619, %v717
        %v719 = vpop.f32.mrb[0].mxu0
        %v720 = vpop.f32.mrb[0].mxu0
        %v721 = vadd.f32 %v624, %v720
        %v722 = vpop.f32.mrb[0].mxu0
        %723 = vdwg.mxu0
        %v724 = vmax.f32 %v694, 0.0
        %v725 = vmax.f32 %v697, 0.0
        %v726 = vmax.f32 %v702, 0.0
        %v727 = vmax.f32 %v705, 0.0
        %v728 = vmax.f32 %v710, 0.0
        %v729 = vmax.f32 %v713, 0.0
        %v730 = vmax.f32 %v718, 0.0
        %v731 = vmax.f32 %v721, 0.0
        %v732 = vld [vmem:[%s5] sm:$0xf]
        %v733 = vld [vmem:[%s5 + $0x4] sm:$0xf]
        %v734 = vld [vmem:[%s5 + $0x8] sm:$0xf]
        %v735 = vld [vmem:[%s5 + $0xc] sm:$0xf]
        %v736 = vld [vmem:[%s5 + $0x10] sm:$0xf]
        %v737 = vld [vmem:[%s5 + $0x14] sm:$0xf]
        %v738 = vld [vmem:[%s5 + $0x18] sm:$0xf]
        %v739 = vld [vmem:[%s5 + $0x1c] sm:$0xf]
        %v740 = vunpack.c.l.bf16 %v732
        %v741 = vunpack.c.l.bf16 %v733
        %v742 = vunpack.c.l.bf16 %v734
        %v743 = vunpack.c.l.bf16 %v735
        %v744 = vunpack.c.l.bf16 %v736
        %v745 = vunpack.c.l.bf16 %v737
        %v746 = vunpack.c.l.bf16 %v738
        %v747 = vunpack.c.l.bf16 %v739
        %749 = vset.pattern.permute.xlu0 0
        %750 = vperm.xlu0 %749, %v740
        %v751 = vpop.permute.xlu0 %750
        %754 = vset.pattern.permute.xlu0 0
        %755 = vperm.xlu0 %754, %v741
        %v756 = vpop.permute.xlu0 %755
        %759 = vset.pattern.permute.xlu0 0
        %760 = vperm.xlu0 %759, %v742
        %v761 = vpop.permute.xlu0 %760
        %764 = vset.pattern.permute.xlu0 0
        %765 = vperm.xlu0 %764, %v743
        %v766 = vpop.permute.xlu0 %765
        %769 = vset.pattern.permute.xlu0 0
        %770 = vperm.xlu0 %769, %v744
        %v771 = vpop.permute.xlu0 %770
        %774 = vset.pattern.permute.xlu0 0
        %775 = vperm.xlu0 %774, %v745
        %v776 = vpop.permute.xlu0 %775
        %779 = vset.pattern.permute.xlu0 0
        %780 = vperm.xlu0 %779, %v746
        %v781 = vpop.permute.xlu0 %780
        %784 = vset.pattern.permute.xlu0 0
        %785 = vperm.xlu0 %784, %v747
        %v786 = vpop.permute.xlu0 %785
        %v788 = vmul.f32 %v751, %v724
        %v789 = vmul.f32 %v756, %v725
        %v790 = vmul.f32 %v761, %v726
        %v791 = vmul.f32 %v766, %v727
        %v792 = vmul.f32 %v771, %v728
        %v793 = vmul.f32 %v776, %v729
        %v794 = vmul.f32 %v781, %v730
        %v795 = vmul.f32 %v786, %v731
        %v796 = vadd.f32 %v788, %v789
        %v797 = vadd.f32 %v796, %v790
        %v798 = vadd.f32 %v797, %v791
        %v799 = vadd.f32 %v798, %v792
        %v800 = vadd.f32 %v799, %v793
        %v801 = vadd.f32 %v800, %v794
        %v802 = vadd.f32 %v801, %v795
        %v803 = vrot.slane %v802, 4
        %v804 = vadd.f32 %v802, %v803
        %v805 = vrot.slane %v804, 2
        %v806 = vadd.f32 %v804, %v805
        %v807 = vrot.slane %v806, 1
        %v808 = vadd.f32 %v806, %v807
        %v809 = vld [vmem:[#allocation2] sm:$0x1]
        %811 = vset.pattern.permute.xlu0 0
        %812 = vperm.xlu0 %811, %v809
        %v813 = vpop.permute.xlu0 %812
        %v815 = vlaneseq
        %v816 = vshrl.u32 %v815, 7
        %v817 = vsub.s32 0, %v816
        %v818 = vrot.slane %v813, %v817
        %v819 = vadd.f32 %v808, %v818
        %820 = vst [vmem:[%s270] sm:$0x1] %v819
        %s821 = sand.u32 %s183, 1
        %s822 = scalar_lea.sflag [#allocation4], %s821
        %s823 = sand.u32 %s183, 1
        %s824 = scalar_lea.vmem [#allocation3], %s823
        // Predicated region
        $region49: #{tpu_custom_call.1} parent=47 // pred_check
          %p825 = pneg %p193
        $region50: #{tpu_custom_call.1} parent=47 // pred_check_branch
          %827 = sbr.rel (%p825) target = $region52
        $region51: #{tpu_custom_call.1} parent=47 // pred_region
          %s829 = ssub.s32 16, 16
          %830 = vsyncadd %s822, %s829
          %s831 = smul.addr %s23, 16
          %s832 = scalar_lea.hbm %s7, %s831
          %s834 = sshll.u32 %s824, 4
          %s835 = int_to_ptr.vmem [resolvable:$true] %s834
          %837 = dma.vmem_to_hbm [thread:$0]  %s835, 16, %s832, %s822
        $region52: #{tpu_custom_call.1} parent=47 // pred_fallthru
          _
      $region48: #{tpu_custom_call.1} parent=5 // pred_fallthru
        _
      %p838 = scmp.le.s32.totalorder 2, %s18
      // Predicated region
      $region53: #{tpu_custom_call.1} parent=5 // pred_check
        %p839 = pneg %p838
      $region54: #{tpu_custom_call.1} parent=5 // pred_check_branch
        %841 = sbr.rel (%p839) target = $region56
      $region55: #{tpu_custom_call.1} parent=5 // pred_region
        %s842 = ssub.s32 %s18, 2
        // Predicated region
        $region57: #{tpu_custom_call.1} parent=55 // pred_check
          %p843 = pneg %p199
        $region58: #{tpu_custom_call.1} parent=55 // pred_check_branch
          %845 = sbr.rel (%p843) target = $region60
        $region59: #{tpu_custom_call.1} parent=55 // pred_region
          %s846 = sand.u32 %s184, 1
          %s847 = scalar_lea.sflag [#allocation4], %s846
          %s848 = sand.u32 %s184, 1
          %s849 = scalar_lea.vmem [#allocation3], %s848
          %850 = dma.done %s847, 16
        $region60: #{tpu_custom_call.1} parent=55 // pred_fallthru
          _
      $region56: #{tpu_custom_call.1} parent=5 // pred_fallthru
        _
    $region6: #{tpu_custom_call.1} parent=1 // loop_footer
      %s22 = sadd.s32 1, %s18
    $region7: #{tpu_custom_call.1} parent=1 // loop_footer_branch
      %17 = sbr.rel target = $region3
    $region8: #{tpu_custom_call.1} parent=1 // loop_exit
      _
    %851 = vsyncpa [#allocation4], 1
    %s852 = scalar_lea.sflag [#allocation4], 1
    %853 = vsyncpa %s852, 1

</llo_original>
